<compile_context>
chip_gen: v6e
topology: v6e:2x2x1
jax: 0.10.0
libtpu: 0.0.40
codegen_flags: <defaults>
</compile_context>

<pallas_src>
import jax
import jax.numpy as jnp
from jax import lax
from jax.experimental import pallas as pl
from jax.experimental.pallas import tpu as pltpu

IN_FEATURES = 6
HIDDEN = 3
NUM_CLASSES = 2          # NumberOfUniqueClasses
LANES = 128
CHUNK_ROWS = 32          # inner-loop chunk: 32 sublane-rows x 128 lanes = 4096 samples


def _round_up(a, m):
    return ((a + m - 1) // m) * m


def mlp_kernel(w1_ref, b1_ref, w2_ref, b2_ref, x_ref, o_ref):
    # x_ref: (6, block_rows, 128) VMEM (feature-major, lane/sublane dense).
    # w1_ref: (3, 6), b1_ref: (3,), w2_ref: (2, 3), b2_ref: (2,)  -- SMEM f32 scalars.
    # o_ref: (2, block_rows, 128).
    block_rows = x_ref.shape[1]
    num_chunks = block_rows // CHUNK_ROWS  # block_rows is always a CHUNK_ROWS multiple

    def chunk_body(c, carry):
        r0 = pl.multiple_of(c * CHUNK_ROWS, CHUNK_ROWS)
        sl = pl.ds(r0, CHUNK_ROWS)

        # 6 input slabs for this chunk (compute in f32 even if streamed as bf16).
        xs = [x_ref[k, sl, :].astype(jnp.float32) for k in range(IN_FEATURES)]

        # Hidden layer: h_j = relu(sum_k w1[j,k] * x_k + b1[j]) -- unrolled VPU FMAs.
        hs = []
        for j in range(HIDDEN):
            acc = xs[0] * w1_ref[j, 0]
            for k in range(1, IN_FEATURES):
                acc = acc + xs[k] * w1_ref[j, k]
            hs.append(jnp.maximum(acc + b1_ref[j], 0.0))

        # Output layer: y_c = sum_j w2[c,j] * h_j + b2[c]; unmasked 128-lane stores.
        for cls in range(NUM_CLASSES):
            y = hs[0] * w2_ref[cls, 0]
            for j in range(1, HIDDEN):
                y = y + hs[j] * w2_ref[cls, j]
            o_ref[cls, sl, :] = (y + b2_ref[cls]).astype(o_ref.dtype)
        return carry

    lax.fori_loop(0, num_chunks, chunk_body, 0, unroll=False)


def _mlp_pallas(x_fm, w1, b1, w2, b2, *, block_rows, out_dtype=None):
    """Zero-glue feature-major entry: x_fm (6, rows, 128) -> (2, rows, 128).

    Upstream code that can produce feature-major activations (and consume (2, rows, 128)
    logits, e.g. argmax over axis 0) should call this directly and skip all wrapper
    layout passes.  Requires rows % block_rows == 0 and block_rows % CHUNK_ROWS == 0.
    """
    feat, rows, lanes = x_fm.shape
    assert feat == IN_FEATURES and lanes == LANES
    assert block_rows % CHUNK_ROWS == 0 and rows % block_rows == 0
    n_blocks = rows // block_rows
    out_dtype = x_fm.dtype if out_dtype is None else out_dtype

    # Scoped-VMEM budget: double-buffered in+out tiles plus headroom, capped well
    # below the v7x 64 MiB physical ceiling (v5e/v6e have 128 MiB physical).
    in_step = IN_FEATURES * block_rows * LANES * jnp.dtype(x_fm.dtype).itemsize
    out_step = NUM_CLASSES * block_rows * LANES * jnp.dtype(out_dtype).itemsize
    vmem_limit = min(max(2 * (in_step + out_step) + (2 << 20), 8 << 20), 48 << 20)

    smem = lambda: pl.BlockSpec(memory_space=pltpu.MemorySpace.SMEM)

    return pl.pallas_call(
        mlp_kernel,
        out_shape=jax.ShapeDtypeStruct((NUM_CLASSES, rows, LANES), out_dtype),
        grid_spec=pl.GridSpec(
            grid=(n_blocks,),
            in_specs=[
                smem(),  # w1 (3, 6)
                smem(),  # b1 (3,)
                smem(),  # w2 (2, 3)
                smem(),  # b2 (2,)
                pl.BlockSpec((IN_FEATURES, block_rows, LANES), lambda i: (0, i, 0)),
            ],
            out_specs=pl.BlockSpec((NUM_CLASSES, block_rows, LANES), lambda i: (0, i, 0)),
        ),
        compiler_params=pltpu.CompilerParams(
            dimension_semantics=("parallel",),   # shards blocks across v7x's 2 TCs
            vmem_limit_bytes=int(vmem_limit),
        ),
    )(w1, b1, w2, b2, x_fm)


def _pick_block_rows(rows_needed, block_rows_cap):
    """Adaptive tile: big tiles for throughput, >=2 grid steps for v7x dual-TC,
    and no gratuitous padding for tiny batches."""
    cap = _round_up(max(block_rows_cap, CHUNK_ROWS), CHUNK_ROWS)
    if rows_needed <= 2 * CHUNK_ROWS:
        return _round_up(max(rows_needed, 1), CHUNK_ROWS)
    half = _round_up(-(-rows_needed // 2), CHUNK_ROWS)   # ceil(rows/2), chunk-aligned
    return max(CHUNK_ROWS, min(cap, half))


def mlp_forward(x, w1, b1, w2, b2, *, block_rows=1024, dtype=jnp.float32):
    """PyTorch-facing forward pass matching MLP: x (..., 6) -> (N, 2) logits.

    x is flattened to (-1, 6) (mirroring x.view(-1, 6)).  Weights use the PyTorch
    nn.Linear (out, in) layout: w1 (3, 6), b1 (3,), w2 (2, 3), b2 (2,).
    dtype=jnp.bfloat16 halves streamed HBM bytes on v6e/v7x (compute stays f32);
    keep the default f32 on v5e.
    """
    x = x.reshape(-1, IN_FEATURES).astype(dtype)
    n = x.shape[0]
    w1 = w1.astype(jnp.float32)
    b1 = b1.astype(jnp.float32)
    w2 = w2.astype(jnp.float32)
    b2 = b2.astype(jnp.float32)

    rows_needed = -(-n // LANES)                       # ceil(n / 128)
    block_rows_eff = _pick_block_rows(rows_needed, block_rows)
    n_blocks = -(-rows_needed // block_rows_eff)
    rows = n_blocks * block_rows_eff
    n_pad = rows * LANES

    # Minimal layout glue (single pad + single transpose).  This is the only extra HBM
    # traffic outside the kernel; feature-major producers should use _mlp_pallas directly.
    x_pad = jnp.pad(x, ((0, n_pad - n), (0, 0)))
    x_fm = jnp.transpose(x_pad.reshape(rows, LANES, IN_FEATURES), (2, 0, 1))

    out_fm = _mlp_pallas(x_fm, w1, b1, w2, b2, block_rows=block_rows_eff, out_dtype=dtype)

    # Back to the PyTorch-facing (N, 2).  Padded-tail logits (relu(b1)@w2 + b2) are
    # nonzero but sliced off here; keep this slice if the padding scheme changes.
    y = out_fm.reshape(NUM_CLASSES, n_pad)[:, :n]
    return jnp.transpose(y)


def init_params(key):
    """Synthetic params with nn.Linear(6,3) / nn.Linear(3,2) shapes ((out, in) layout)."""
    k1, k2, k3, k4 = jax.random.split(key, 4)
    bound1 = 1.0 / jnp.sqrt(jnp.float32(IN_FEATURES))
    bound2 = 1.0 / jnp.sqrt(jnp.float32(HIDDEN))
    w1 = jax.random.uniform(k1, (HIDDEN, IN_FEATURES), jnp.float32, -bound1, bound1)
    b1 = jax.random.uniform(k2, (HIDDEN,), jnp.float32, -bound1, bound1)
    w2 = jax.random.uniform(k3, (NUM_CLASSES, HIDDEN), jnp.float32, -bound2, bound2)
    b2 = jax.random.uniform(k4, (NUM_CLASSES,), jnp.float32, -bound2, bound2)
    return w1, b1, w2, b2


def reference_forward(x, w1, b1, w2, b2):
    x = x.reshape(-1, IN_FEATURES).astype(jnp.float32)
    h = jnp.maximum(
        jnp.einsum("nk,jk->nj", x, w1, precision=jax.lax.Precision.HIGHEST) + b1, 0.0
    )
    return jnp.einsum("nj,cj->nc", h, w2, precision=jax.lax.Precision.HIGHEST) + b2


if __name__ == "__main__":
    key = jax.random.PRNGKey(0)
    kx_small, kx_big, kp = jax.random.split(key, 3)
    w1, b1, w2, b2 = init_params(kp)

    # Small case consistent with the module: batch=8, features=6 (x.view(-1, 6)).
    x_small = jax.random.normal(kx_small, (8, IN_FEATURES), jnp.float32)
    out_small = jax.block_until_ready(mlp_forward(x_small, w1, b1, w2, b2))
    ref_small = reference_forward(x_small, w1, b1, w2, b2)
    assert out_small.shape == (8, NUM_CLASSES)
    assert jnp.allclose(out_small, ref_small, atol=1e-5, rtol=1e-5), "mismatch (small)"

    # Larger, non-tile-multiple batch: exercises the adaptive tile picker (>=2 grid
    # steps), the inner chunk loop, and the zero-padded tail slice.
    x_big = jax.random.normal(kx_big, (70000, IN_FEATURES), jnp.float32)
    out_big = jax.block_until_ready(mlp_forward(x_big, w1, b1, w2, b2))
    ref_big = reference_forward(x_big, w1, b1, w2, b2)
    assert out_big.shape == (70000, NUM_CLASSES)
    assert jnp.allclose(out_big, ref_big, atol=1e-5, rtol=1e-5), "mismatch (big)"

    print("KERNEL_OK")
</pallas_src>

<mosaic_0001>
module attributes {stable_mosaic.version = 11 : i64} {
  func.func @mlp_kernel(%arg0: i32, %arg1: memref<3x6xf32, #tpu.memory_space<smem>>, %arg2: memref<3xf32, #tpu.memory_space<smem>>, %arg3: memref<2x3xf32, #tpu.memory_space<smem>>, %arg4: memref<2xf32, #tpu.memory_space<smem>>, %arg5: memref<6x32x128xf32, #tpu.memory_space<vmem>>, %arg6: memref<2x32x128xf32, #tpu.memory_space<vmem>>) attributes {dimension_semantics = [#tpu.dimension_semantics<parallel>], iteration_bounds = array<i64: 1>, scalar_prefetch = 0 : i64, scratch_operands = 0 : i64, tpu.core_type = #tpu.core_type<tc>, window_params = [{transform_indices = @transform_0, window_bounds = array<i64: 3, 6>}, {transform_indices = @transform_1, window_bounds = array<i64: 3>}, {transform_indices = @transform_2, window_bounds = array<i64: 2, 3>}, {transform_indices = @transform_3, window_bounds = array<i64: 2>}, {transform_indices = @transform_4, window_bounds = array<i64: 6, 32, 128>}, {transform_indices = @transform_5, window_bounds = array<i64: 2, 32, 128>}]} {
    %c0_i32 = arith.constant 0 : i32
    %c32_i32 = arith.constant 32 : i32
    %0 = arith.muli %c0_i32, %c32_i32 : i32
    %1 = tpu.assume_multiple %0, 32 : i32
    %c0 = arith.constant 0 : index
    %2 = arith.index_cast %1 : i32 to index
    %c0_0 = arith.constant 0 : index
    %3 = vector.load %arg5[%c0, %2, %c0_0] : memref<6x32x128xf32, #tpu.memory_space<vmem>>, vector<1x32x128xf32>
    %4 = vector.shape_cast %3 : vector<1x32x128xf32> to vector<32x128xf32>
    %c1 = arith.constant 1 : index
    %5 = arith.index_cast %1 : i32 to index
    %c0_1 = arith.constant 0 : index
    %6 = vector.load %arg5[%c1, %5, %c0_1] : memref<6x32x128xf32, #tpu.memory_space<vmem>>, vector<1x32x128xf32>
    %7 = vector.shape_cast %6 : vector<1x32x128xf32> to vector<32x128xf32>
    %c2 = arith.constant 2 : index
    %8 = arith.index_cast %1 : i32 to index
    %c0_2 = arith.constant 0 : index
    %9 = vector.load %arg5[%c2, %8, %c0_2] : memref<6x32x128xf32, #tpu.memory_space<vmem>>, vector<1x32x128xf32>
    %10 = vector.shape_cast %9 : vector<1x32x128xf32> to vector<32x128xf32>
    %c3 = arith.constant 3 : index
    %11 = arith.index_cast %1 : i32 to index
    %c0_3 = arith.constant 0 : index
    %12 = vector.load %arg5[%c3, %11, %c0_3] : memref<6x32x128xf32, #tpu.memory_space<vmem>>, vector<1x32x128xf32>
    %13 = vector.shape_cast %12 : vector<1x32x128xf32> to vector<32x128xf32>
    %c4 = arith.constant 4 : index
    %14 = arith.index_cast %1 : i32 to index
    %c0_4 = arith.constant 0 : index
    %15 = vector.load %arg5[%c4, %14, %c0_4] : memref<6x32x128xf32, #tpu.memory_space<vmem>>, vector<1x32x128xf32>
    %16 = vector.shape_cast %15 : vector<1x32x128xf32> to vector<32x128xf32>
    %c5 = arith.constant 5 : index
    %17 = arith.index_cast %1 : i32 to index
    %c0_5 = arith.constant 0 : index
    %18 = vector.load %arg5[%c5, %17, %c0_5] : memref<6x32x128xf32, #tpu.memory_space<vmem>>, vector<1x32x128xf32>
    %19 = vector.shape_cast %18 : vector<1x32x128xf32> to vector<32x128xf32>
    %c0_6 = arith.constant 0 : index
    %c0_7 = arith.constant 0 : index
    %20 = memref.load %arg1[%c0_6, %c0_7] : memref<3x6xf32, #tpu.memory_space<smem>>
    %21 = vector.broadcast %20 : f32 to vector<32x128xf32>
    %22 = arith.mulf %4, %21 : vector<32x128xf32>
    %c0_8 = arith.constant 0 : index
    %c1_9 = arith.constant 1 : index
    %23 = memref.load %arg1[%c0_8, %c1_9] : memref<3x6xf32, #tpu.memory_space<smem>>
    %24 = vector.broadcast %23 : f32 to vector<32x128xf32>
    %25 = arith.mulf %7, %24 : vector<32x128xf32>
    %26 = arith.addf %22, %25 : vector<32x128xf32>
    %c0_10 = arith.constant 0 : index
    %c2_11 = arith.constant 2 : index
    %27 = memref.load %arg1[%c0_10, %c2_11] : memref<3x6xf32, #tpu.memory_space<smem>>
    %28 = vector.broadcast %27 : f32 to vector<32x128xf32>
    %29 = arith.mulf %10, %28 : vector<32x128xf32>
    %30 = arith.addf %26, %29 : vector<32x128xf32>
    %c0_12 = arith.constant 0 : index
    %c3_13 = arith.constant 3 : index
    %31 = memref.load %arg1[%c0_12, %c3_13] : memref<3x6xf32, #tpu.memory_space<smem>>
    %32 = vector.broadcast %31 : f32 to vector<32x128xf32>
    %33 = arith.mulf %13, %32 : vector<32x128xf32>
    %34 = arith.addf %30, %33 : vector<32x128xf32>
    %c0_14 = arith.constant 0 : index
    %c4_15 = arith.constant 4 : index
    %35 = memref.load %arg1[%c0_14, %c4_15] : memref<3x6xf32, #tpu.memory_space<smem>>
    %36 = vector.broadcast %35 : f32 to vector<32x128xf32>
    %37 = arith.mulf %16, %36 : vector<32x128xf32>
    %38 = arith.addf %34, %37 : vector<32x128xf32>
    %c0_16 = arith.constant 0 : index
    %c5_17 = arith.constant 5 : index
    %39 = memref.load %arg1[%c0_16, %c5_17] : memref<3x6xf32, #tpu.memory_space<smem>>
    %40 = vector.broadcast %39 : f32 to vector<32x128xf32>
    %41 = arith.mulf %19, %40 : vector<32x128xf32>
    %42 = arith.addf %38, %41 : vector<32x128xf32>
    %c0_18 = arith.constant 0 : index
    %43 = memref.load %arg2[%c0_18] : memref<3xf32, #tpu.memory_space<smem>>
    %44 = vector.broadcast %43 : f32 to vector<32x128xf32>
    %45 = arith.addf %42, %44 : vector<32x128xf32>
    %cst = arith.constant 0.000000e+00 : f32
    %46 = vector.broadcast %cst : f32 to vector<32x128xf32>
    %47 = arith.maximumf %45, %46 : vector<32x128xf32>
    %c1_19 = arith.constant 1 : index
    %c0_20 = arith.constant 0 : index
    %48 = memref.load %arg1[%c1_19, %c0_20] : memref<3x6xf32, #tpu.memory_space<smem>>
    %49 = vector.broadcast %48 : f32 to vector<32x128xf32>
    %50 = arith.mulf %4, %49 : vector<32x128xf32>
    %c1_21 = arith.constant 1 : index
    %c1_22 = arith.constant 1 : index
    %51 = memref.load %arg1[%c1_21, %c1_22] : memref<3x6xf32, #tpu.memory_space<smem>>
    %52 = vector.broadcast %51 : f32 to vector<32x128xf32>
    %53 = arith.mulf %7, %52 : vector<32x128xf32>
    %54 = arith.addf %50, %53 : vector<32x128xf32>
    %c1_23 = arith.constant 1 : index
    %c2_24 = arith.constant 2 : index
    %55 = memref.load %arg1[%c1_23, %c2_24] : memref<3x6xf32, #tpu.memory_space<smem>>
    %56 = vector.broadcast %55 : f32 to vector<32x128xf32>
    %57 = arith.mulf %10, %56 : vector<32x128xf32>
    %58 = arith.addf %54, %57 : vector<32x128xf32>
    %c1_25 = arith.constant 1 : index
    %c3_26 = arith.constant 3 : index
    %59 = memref.load %arg1[%c1_25, %c3_26] : memref<3x6xf32, #tpu.memory_space<smem>>
    %60 = vector.broadcast %59 : f32 to vector<32x128xf32>
    %61 = arith.mulf %13, %60 : vector<32x128xf32>
    %62 = arith.addf %58, %61 : vector<32x128xf32>
    %c1_27 = arith.constant 1 : index
    %c4_28 = arith.constant 4 : index
    %63 = memref.load %arg1[%c1_27, %c4_28] : memref<3x6xf32, #tpu.memory_space<smem>>
    %64 = vector.broadcast %63 : f32 to vector<32x128xf32>
    %65 = arith.mulf %16, %64 : vector<32x128xf32>
    %66 = arith.addf %62, %65 : vector<32x128xf32>
    %c1_29 = arith.constant 1 : index
    %c5_30 = arith.constant 5 : index
    %67 = memref.load %arg1[%c1_29, %c5_30] : memref<3x6xf32, #tpu.memory_space<smem>>
    %68 = vector.broadcast %67 : f32 to vector<32x128xf32>
    %69 = arith.mulf %19, %68 : vector<32x128xf32>
    %70 = arith.addf %66, %69 : vector<32x128xf32>
    %c1_31 = arith.constant 1 : index
    %71 = memref.load %arg2[%c1_31] : memref<3xf32, #tpu.memory_space<smem>>
    %72 = vector.broadcast %71 : f32 to vector<32x128xf32>
    %73 = arith.addf %70, %72 : vector<32x128xf32>
    %cst_32 = arith.constant 0.000000e+00 : f32
    %74 = vector.broadcast %cst_32 : f32 to vector<32x128xf32>
    %75 = arith.maximumf %73, %74 : vector<32x128xf32>
    %c2_33 = arith.constant 2 : index
    %c0_34 = arith.constant 0 : index
    %76 = memref.load %arg1[%c2_33, %c0_34] : memref<3x6xf32, #tpu.memory_space<smem>>
    %77 = vector.broadcast %76 : f32 to vector<32x128xf32>
    %78 = arith.mulf %4, %77 : vector<32x128xf32>
    %c2_35 = arith.constant 2 : index
    %c1_36 = arith.constant 1 : index
    %79 = memref.load %arg1[%c2_35, %c1_36] : memref<3x6xf32, #tpu.memory_space<smem>>
    %80 = vector.broadcast %79 : f32 to vector<32x128xf32>
    %81 = arith.mulf %7, %80 : vector<32x128xf32>
    %82 = arith.addf %78, %81 : vector<32x128xf32>
    %c2_37 = arith.constant 2 : index
    %c2_38 = arith.constant 2 : index
    %83 = memref.load %arg1[%c2_37, %c2_38] : memref<3x6xf32, #tpu.memory_space<smem>>
    %84 = vector.broadcast %83 : f32 to vector<32x128xf32>
    %85 = arith.mulf %10, %84 : vector<32x128xf32>
    %86 = arith.addf %82, %85 : vector<32x128xf32>
    %c2_39 = arith.constant 2 : index
    %c3_40 = arith.constant 3 : index
    %87 = memref.load %arg1[%c2_39, %c3_40] : memref<3x6xf32, #tpu.memory_space<smem>>
    %88 = vector.broadcast %87 : f32 to vector<32x128xf32>
    %89 = arith.mulf %13, %88 : vector<32x128xf32>
    %90 = arith.addf %86, %89 : vector<32x128xf32>
    %c2_41 = arith.constant 2 : index
    %c4_42 = arith.constant 4 : index
    %91 = memref.load %arg1[%c2_41, %c4_42] : memref<3x6xf32, #tpu.memory_space<smem>>
    %92 = vector.broadcast %91 : f32 to vector<32x128xf32>
    %93 = arith.mulf %16, %92 : vector<32x128xf32>
    %94 = arith.addf %90, %93 : vector<32x128xf32>
    %c2_43 = arith.constant 2 : index
    %c5_44 = arith.constant 5 : index
    %95 = memref.load %arg1[%c2_43, %c5_44] : memref<3x6xf32, #tpu.memory_space<smem>>
    %96 = vector.broadcast %95 : f32 to vector<32x128xf32>
    %97 = arith.mulf %19, %96 : vector<32x128xf32>
    %98 = arith.addf %94, %97 : vector<32x128xf32>
    %c2_45 = arith.constant 2 : index
    %99 = memref.load %arg2[%c2_45] : memref<3xf32, #tpu.memory_space<smem>>
    %100 = vector.broadcast %99 : f32 to vector<32x128xf32>
    %101 = arith.addf %98, %100 : vector<32x128xf32>
    %cst_46 = arith.constant 0.000000e+00 : f32
    %102 = vector.broadcast %cst_46 : f32 to vector<32x128xf32>
    %103 = arith.maximumf %101, %102 : vector<32x128xf32>
    %c0_47 = arith.constant 0 : index
    %c0_48 = arith.constant 0 : index
    %104 = memref.load %arg3[%c0_47, %c0_48] : memref<2x3xf32, #tpu.memory_space<smem>>
    %105 = vector.broadcast %104 : f32 to vector<32x128xf32>
    %106 = arith.mulf %47, %105 : vector<32x128xf32>
    %c0_49 = arith.constant 0 : index
    %c1_50 = arith.constant 1 : index
    %107 = memref.load %arg3[%c0_49, %c1_50] : memref<2x3xf32, #tpu.memory_space<smem>>
    %108 = vector.broadcast %107 : f32 to vector<32x128xf32>
    %109 = arith.mulf %75, %108 : vector<32x128xf32>
    %110 = arith.addf %106, %109 : vector<32x128xf32>
    %c0_51 = arith.constant 0 : index
    %c2_52 = arith.constant 2 : index
    %111 = memref.load %arg3[%c0_51, %c2_52] : memref<2x3xf32, #tpu.memory_space<smem>>
    %112 = vector.broadcast %111 : f32 to vector<32x128xf32>
    %113 = arith.mulf %103, %112 : vector<32x128xf32>
    %114 = arith.addf %110, %113 : vector<32x128xf32>
    %c0_53 = arith.constant 0 : index
    %115 = memref.load %arg4[%c0_53] : memref<2xf32, #tpu.memory_space<smem>>
    %116 = vector.broadcast %115 : f32 to vector<32x128xf32>
    %117 = arith.addf %114, %116 : vector<32x128xf32>
    %c0_54 = arith.constant 0 : index
    %118 = arith.index_cast %1 : i32 to index
    %c0_55 = arith.constant 0 : index
    %119 = vector.load %arg6[%c0_54, %118, %c0_55] : memref<2x32x128xf32, #tpu.memory_space<vmem>>, vector<1x32x128xf32>
    %120 = vector.shape_cast %119 : vector<1x32x128xf32> to vector<32x128xf32>
    %121 = vector.shape_cast %117 : vector<32x128xf32> to vector<1x32x128xf32>
    tpu.vector_store %arg6[%c0_54, %118, %c0_55], %121 {strides = array<i32>} : memref<2x32x128xf32, #tpu.memory_space<vmem>>, vector<1x32x128xf32>,
    %c1_56 = arith.constant 1 : index
    %c0_57 = arith.constant 0 : index
    %122 = memref.load %arg3[%c1_56, %c0_57] : memref<2x3xf32, #tpu.memory_space<smem>>
    %123 = vector.broadcast %122 : f32 to vector<32x128xf32>
    %124 = arith.mulf %47, %123 : vector<32x128xf32>
    %c1_58 = arith.constant 1 : index
    %c1_59 = arith.constant 1 : index
    %125 = memref.load %arg3[%c1_58, %c1_59] : memref<2x3xf32, #tpu.memory_space<smem>>
    %126 = vector.broadcast %125 : f32 to vector<32x128xf32>
    %127 = arith.mulf %75, %126 : vector<32x128xf32>
    %128 = arith.addf %124, %127 : vector<32x128xf32>
    %c1_60 = arith.constant 1 : index
    %c2_61 = arith.constant 2 : index
    %129 = memref.load %arg3[%c1_60, %c2_61] : memref<2x3xf32, #tpu.memory_space<smem>>
    %130 = vector.broadcast %129 : f32 to vector<32x128xf32>
    %131 = arith.mulf %103, %130 : vector<32x128xf32>
    %132 = arith.addf %128, %131 : vector<32x128xf32>
    %c1_62 = arith.constant 1 : index
    %133 = memref.load %arg4[%c1_62] : memref<2xf32, #tpu.memory_space<smem>>
    %134 = vector.broadcast %133 : f32 to vector<32x128xf32>
    %135 = arith.addf %132, %134 : vector<32x128xf32>
    %c1_63 = arith.constant 1 : index
    %136 = arith.index_cast %1 : i32 to index
    %c0_64 = arith.constant 0 : index
    %137 = vector.load %arg6[%c1_63, %136, %c0_64] : memref<2x32x128xf32, #tpu.memory_space<vmem>>, vector<1x32x128xf32>
    %138 = vector.shape_cast %137 : vector<1x32x128xf32> to vector<32x128xf32>
    %139 = vector.shape_cast %135 : vector<32x128xf32> to vector<1x32x128xf32>
    tpu.vector_store %arg6[%c1_63, %136, %c0_64], %139 {strides = array<i32>} : memref<2x32x128xf32, #tpu.memory_space<vmem>>, vector<1x32x128xf32>,
    %c1_i32 = arith.constant 1 : i32
    return
  }
  func.func @transform_0(%arg0: i32) -> (i32, i32) {
    %c0_i32 = arith.constant 0 : i32
    %c0_i32_0 = arith.constant 0 : i32
    %c0_i32_1 = arith.constant 0 : i32
    return %c0_i32, %c0_i32_0 : i32, i32
  }
  func.func @transform_1(%arg0: i32) -> i32 {
    %c0_i32 = arith.constant 0 : i32
    %c0_i32_0 = arith.constant 0 : i32
    return %c0_i32 : i32
  }
  func.func @transform_2(%arg0: i32) -> (i32, i32) {
    %c0_i32 = arith.constant 0 : i32
    %c0_i32_0 = arith.constant 0 : i32
    %c0_i32_1 = arith.constant 0 : i32
    return %c0_i32, %c0_i32_0 : i32, i32
  }
  func.func @transform_3(%arg0: i32) -> i32 {
    %c0_i32 = arith.constant 0 : i32
    %c0_i32_0 = arith.constant 0 : i32
    return %c0_i32 : i32
  }
  func.func @transform_4(%arg0: i32) -> (i32, i32, i32) {
    %c0_i32 = arith.constant 0 : i32
    %c0_i32_0 = arith.constant 0 : i32
    %c0_i32_1 = arith.constant 0 : i32
    return %c0_i32, %arg0, %c0_i32_0 : i32, i32, i32
  }
  func.func @transform_5(%arg0: i32) -> (i32, i32, i32) {
    %c0_i32 = arith.constant 0 : i32
    %c0_i32_0 = arith.constant 0 : i32
    %c0_i32_1 = arith.constant 0 : i32
    return %c0_i32, %arg0, %c0_i32_0 : i32, i32, i32
  }
}

</mosaic_0001>

<llo_original>
// kernel: tpu_custom_call.1
$region0: #{tpu_custom_call.1}
  #allocation0 [shape = 'u32[]', space=smem, size = 0x4, offset = 0x4, fixed_abs, tag = 'smem constant byte address 0x4 - core index']
  #allocation1 [shape = 'u32[144,128]{1,0:T(1,128)}', space=vmem, size = 0x12000, scoped, tag = 'internal scratch']
  %s0 = inlined_call_operand.hbm [shape: f32[3,6], index: 0, kind: input, shape index: {}]
  %s1 = inlined_call_operand.vmem [shape: f32[3], index: 1, kind: input, shape index: {}]
  %s2 = inlined_call_operand.vmem [shape: f32[2,3], index: 2, kind: input, shape index: {}]
  %s3 = inlined_call_operand.vmem [shape: f32[2], index: 3, kind: input, shape index: {}]
  %s4 = inlined_call_operand.hbm [shape: f32[6,32,128], index: 4, kind: input, shape index: {}]
  %s5 = inlined_call_operand.hbm [shape: f32[2,32,128], index: 5, kind: output, shape index: {}]
  %s6 = sld [smem:[#allocation0]]
  $region50: #{tpu_custom_call.1} parent=0
    _
  %s8 = ssub.s32 1, %s6
  %s9 = scalar_select 0, %s8, %s6
  $region1: #{tpu_custom_call.1} parent=0
    #allocation2 [shape = 'u8[2048]{0}', space=smem, size = 0x800, scoped, tag = 'input window, operand 0, single buffered']
    #allocation3 [shape = 's32[1]{0}', space=sflag, size = 0x4, scoped, tag = 'scoped memory for tpu_custom_call.1']
    #allocation4 [shape = 's32[1]{0}', space=sflag, size = 0x4, scoped, tag = 'scoped memory for tpu_custom_call.1']
    #allocation5 [shape = 's32[1]{0}', space=sflag, size = 0x4, scoped, tag = 'scoped memory for tpu_custom_call.1']
    #allocation6 [shape = 's32[1]{0}', space=sflag, size = 0x4, scoped, tag = 'scoped memory for tpu_custom_call.1']
    #allocation7 [shape = 'u8[512]{0}', space=smem, size = 0x200, scoped, tag = 'input window, operand 1, single buffered']
    #allocation8 [shape = 'u8[1024]{0}', space=smem, size = 0x400, scoped, tag = 'input window, operand 2, single buffered']
    #allocation9 [shape = 's32[1]{0}', space=sflag, size = 0x4, scoped, tag = 'scoped memory for tpu_custom_call.1']
    #allocation10 [shape = 'u8[512]{0}', space=smem, size = 0x200, scoped, tag = 'input window, operand 3, single buffered']
    #allocation11 [shape = 'u8[98304]{0}', space=vmem, size = 0x18000, scoped, tag = 'input window, operand 4, single buffered']
    #allocation12 [shape = 'u8[32768]{0}', space=vmem, size = 0x8000, scoped, tag = 'output window, operand 0, single buffered']
    %10 = vsyncpa [#allocation5], 0
    %11 = vsyncpa [#allocation6], 0
    %12 = vsyncpa [#allocation9], 0
    %13 = vsyncpa [#allocation3], 0
    %14 = vsyncpa [#allocation4], 0
    // Predicated region
    $region2: #{tpu_custom_call.1} parent=1 // pred_check
      _
    $region3: #{tpu_custom_call.1} parent=1 // pred_check_branch
      %16 = sbr.rel (0) target = $region5
    $region4: #{tpu_custom_call.1} parent=1 // pred_region
      %s18 = ssub.s32 64, 64
      %19 = vsyncadd [#allocation5], %s18
      %22 = dma.hbm_to_smem %s0, 64, [#allocation2], [#allocation5]
    $region5: #{tpu_custom_call.1} parent=1 // pred_fallthru
      _
    // Predicated region
    $region6: #{tpu_custom_call.1} parent=1 // pred_check
      _
    $region7: #{tpu_custom_call.1} parent=1 // pred_check_branch
      %24 = sbr.rel (0) target = $region9
    $region8: #{tpu_custom_call.1} parent=1 // pred_region
      %s26 = ssub.s32 16, 16
      %27 = vsyncadd [#allocation6], %s26
      %s29 = sshll.u32 %s1, 4
      %s30 = int_to_ptr.vmem [resolvable:$true] %s29
      %32 = dma.vmem_to_smem %s30, 16, [#allocation7], [#allocation6]
    $region9: #{tpu_custom_call.1} parent=1 // pred_fallthru
      _
    // Predicated region
    $region10: #{tpu_custom_call.1} parent=1 // pred_check
      _
    $region11: #{tpu_custom_call.1} parent=1 // pred_check_branch
      %34 = sbr.rel (0) target = $region13
    $region12: #{tpu_custom_call.1} parent=1 // pred_region
      %s36 = ssub.s32 32, 32
      %37 = vsyncadd [#allocation9], %s36
      %s39 = sshll.u32 %s2, 4
      %s40 = int_to_ptr.vmem [resolvable:$true] %s39
      %42 = dma.vmem_to_smem %s40, 32, [#allocation8], [#allocation9]
    $region13: #{tpu_custom_call.1} parent=1 // pred_fallthru
      _
    // Predicated region
    $region14: #{tpu_custom_call.1} parent=1 // pred_check
      _
    $region15: #{tpu_custom_call.1} parent=1 // pred_check_branch
      %44 = sbr.rel (0) target = $region17
    $region16: #{tpu_custom_call.1} parent=1 // pred_region
      %s46 = ssub.s32 16, 16
      %47 = vsyncadd [#allocation9], %s46
      %s49 = sshll.u32 %s3, 4
      %s50 = int_to_ptr.vmem [resolvable:$true] %s49
      %52 = dma.vmem_to_smem %s50, 16, [#allocation10], [#allocation9]
    $region17: #{tpu_custom_call.1} parent=1 // pred_fallthru
      _
    // Predicated region
    $region18: #{tpu_custom_call.1} parent=1 // pred_check
      _
    $region19: #{tpu_custom_call.1} parent=1 // pred_check_branch
      %54 = sbr.rel (0) target = $region21
    $region20: #{tpu_custom_call.1} parent=1 // pred_region
      %s56 = ssub.s32 3072, 3072
      %57 = vsyncadd [#allocation3], %s56
      %s58 = sshll.u32 [#allocation11], 4
      %s59 = int_to_ptr.vmem [resolvable:$true] %s58
      %64 = dma.hbm_to_vmem [thread:$0]  %s4, 3072, %s59, [#allocation3], 128, 128, 8
    $region21: #{tpu_custom_call.1} parent=1 // pred_fallthru
      _
    // Predicated region
    $region22: #{tpu_custom_call.1} parent=1 // pred_check
      _
    $region23: #{tpu_custom_call.1} parent=1 // pred_check_branch
      %66 = sbr.rel (0) target = $region25
    $region24: #{tpu_custom_call.1} parent=1 // pred_region
      %67 = dma.done [#allocation5], 64
    $region25: #{tpu_custom_call.1} parent=1 // pred_fallthru
      _
    // Predicated region
    $region26: #{tpu_custom_call.1} parent=1 // pred_check
      _
    $region27: #{tpu_custom_call.1} parent=1 // pred_check_branch
      %69 = sbr.rel (0) target = $region29
    $region28: #{tpu_custom_call.1} parent=1 // pred_region
      %70 = dma.done [#allocation6], 16
    $region29: #{tpu_custom_call.1} parent=1 // pred_fallthru
      _
    // Predicated region
    $region30: #{tpu_custom_call.1} parent=1 // pred_check
      _
    $region31: #{tpu_custom_call.1} parent=1 // pred_check_branch
      %72 = sbr.rel (0) target = $region33
    $region32: #{tpu_custom_call.1} parent=1 // pred_region
      %73 = dma.done [#allocation9], 32
    $region33: #{tpu_custom_call.1} parent=1 // pred_fallthru
      _
    // Predicated region
    $region34: #{tpu_custom_call.1} parent=1 // pred_check
      _
    $region35: #{tpu_custom_call.1} parent=1 // pred_check_branch
      %75 = sbr.rel (0) target = $region37
    $region36: #{tpu_custom_call.1} parent=1 // pred_region
      %76 = dma.done [#allocation9], 16
    $region37: #{tpu_custom_call.1} parent=1 // pred_fallthru
      _
    // Predicated region
    $region38: #{tpu_custom_call.1} parent=1 // pred_check
      _
    $region39: #{tpu_custom_call.1} parent=1 // pred_check_branch
      %78 = sbr.rel (0) target = $region41
    $region40: #{tpu_custom_call.1} parent=1 // pred_region
      %79 = dma.done [#allocation3], 3072
    $region41: #{tpu_custom_call.1} parent=1 // pred_fallthru
      _
    %80 = sfence
    %v81 = vld [vmem:[#allocation11] sm:$0xff]
    %v82 = vld [vmem:[#allocation11 + $0x8] sm:$0xff]
    %v83 = vld [vmem:[#allocation11 + $0x10] sm:$0xff]
    %v84 = vld [vmem:[#allocation11 + $0x18] sm:$0xff]
    %s85 = sadd.s32 0, 32
    %s86 = scalar_lea.vmem [#allocation11], %s85
    %v87 = vld [vmem:[%s86] sm:$0xff]
    %v88 = vld [vmem:[%s86 + $0x8] sm:$0xff]
    %v89 = vld [vmem:[%s86 + $0x10] sm:$0xff]
    %v90 = vld [vmem:[%s86 + $0x18] sm:$0xff]
    %s91 = sadd.s32 0, 64
    %s92 = scalar_lea.vmem [#allocation11], %s91
    %v93 = vld [vmem:[%s92] sm:$0xff]
    %v94 = vld [vmem:[%s92 + $0x8] sm:$0xff]
    %v95 = vld [vmem:[%s92 + $0x10] sm:$0xff]
    %v96 = vld [vmem:[%s92 + $0x18] sm:$0xff]
    %s97 = sadd.s32 0, 96
    %s98 = scalar_lea.vmem [#allocation11], %s97
    %v99 = vld [vmem:[%s98] sm:$0xff]
    %v100 = vld [vmem:[%s98 + $0x8] sm:$0xff]
    %v101 = vld [vmem:[%s98 + $0x10] sm:$0xff]
    %v102 = vld [vmem:[%s98 + $0x18] sm:$0xff]
    %s103 = sadd.s32 0, 128
    %s104 = scalar_lea.vmem [#allocation11], %s103
    %v105 = vld [vmem:[%s104] sm:$0xff]
    %v106 = vld [vmem:[%s104 + $0x8] sm:$0xff]
    %v107 = vld [vmem:[%s104 + $0x10] sm:$0xff]
    %v108 = vld [vmem:[%s104 + $0x18] sm:$0xff]
    %s109 = sadd.s32 0, 160
    %s110 = scalar_lea.vmem [#allocation11], %s109
    %v111 = vld [vmem:[%s110] sm:$0xff]
    %v112 = vld [vmem:[%s110 + $0x8] sm:$0xff]
    %v113 = vld [vmem:[%s110 + $0x10] sm:$0xff]
    %v114 = vld [vmem:[%s110 + $0x18] sm:$0xff]
    %s115 = sld [smem:[#allocation2]]
    %v116 = vstv %s115
    %v117 = vmul.f32 %v81, %v116
    %v118 = vmul.f32 %v82, %v116
    %v119 = vmul.f32 %v83, %v116
    %v120 = vmul.f32 %v84, %v116
    %s121 = sld [smem:[#allocation2 + $0x1]]
    %v122 = vstv %s121
    %v123 = vmul.f32 %v87, %v122
    %v124 = vmul.f32 %v88, %v122
    %v125 = vmul.f32 %v89, %v122
    %v126 = vmul.f32 %v90, %v122
    %v127 = vadd.f32 %v117, %v123
    %v128 = vadd.f32 %v118, %v124
    %v129 = vadd.f32 %v119, %v125
    %v130 = vadd.f32 %v120, %v126
    %s131 = sld [smem:[#allocation2 + $0x2]]
    %v132 = vstv %s131
    %v133 = vmul.f32 %v93, %v132
    %v134 = vmul.f32 %v94, %v132
    %v135 = vmul.f32 %v95, %v132
    %v136 = vmul.f32 %v96, %v132
    %v137 = vadd.f32 %v127, %v133
    %v138 = vadd.f32 %v128, %v134
    %v139 = vadd.f32 %v129, %v135
    %v140 = vadd.f32 %v130, %v136
    %s141 = sld [smem:[#allocation2 + $0x3]]
    %v142 = vstv %s141
    %v143 = vmul.f32 %v99, %v142
    %v144 = vmul.f32 %v100, %v142
    %v145 = vmul.f32 %v101, %v142
    %v146 = vmul.f32 %v102, %v142
    %v147 = vadd.f32 %v137, %v143
    %v148 = vadd.f32 %v138, %v144
    %v149 = vadd.f32 %v139, %v145
    %v150 = vadd.f32 %v140, %v146
    %s151 = sld [smem:[#allocation2 + $0x4]]
    %v152 = vstv %s151
    %v153 = vmul.f32 %v105, %v152
    %v154 = vmul.f32 %v106, %v152
    %v155 = vmul.f32 %v107, %v152
    %v156 = vmul.f32 %v108, %v152
    %v157 = vadd.f32 %v147, %v153
    %v158 = vadd.f32 %v148, %v154
    %v159 = vadd.f32 %v149, %v155
    %v160 = vadd.f32 %v150, %v156
    %s161 = sld [smem:[#allocation2 + $0x5]]
    %v162 = vstv %s161
    %v163 = vmul.f32 %v111, %v162
    %v164 = vmul.f32 %v112, %v162
    %v165 = vmul.f32 %v113, %v162
    %v166 = vmul.f32 %v114, %v162
    %v167 = vadd.f32 %v157, %v163
    %v168 = vadd.f32 %v158, %v164
    %v169 = vadd.f32 %v159, %v165
    %v170 = vadd.f32 %v160, %v166
    %s171 = sld [smem:[#allocation7]]
    %v172 = vstv %s171
    %v173 = vadd.f32 %v167, %v172
    %v174 = vadd.f32 %v168, %v172
    %v175 = vadd.f32 %v169, %v172
    %v176 = vadd.f32 %v170, %v172
    %v177 = vmax.f32 %v173, 0.0
    %v178 = vmax.f32 %v174, 0.0
    %v179 = vmax.f32 %v175, 0.0
    %v180 = vmax.f32 %v176, 0.0
    %s181 = sld [smem:[#allocation2 + $0x80]]
    %v182 = vstv %s181
    %v183 = vmul.f32 %v81, %v182
    %v184 = vmul.f32 %v82, %v182
    %v185 = vmul.f32 %v83, %v182
    %v186 = vmul.f32 %v84, %v182
    %s187 = sld [smem:[#allocation2 + $0x81]]
    %v188 = vstv %s187
    %v189 = vmul.f32 %v87, %v188
    %v190 = vmul.f32 %v88, %v188
    %v191 = vmul.f32 %v89, %v188
    %v192 = vmul.f32 %v90, %v188
    %v193 = vadd.f32 %v183, %v189
    %v194 = vadd.f32 %v184, %v190
    %v195 = vadd.f32 %v185, %v191
    %v196 = vadd.f32 %v186, %v192
    %s197 = sld [smem:[#allocation2 + $0x82]]
    %v198 = vstv %s197
    %v199 = vmul.f32 %v93, %v198
    %v200 = vmul.f32 %v94, %v198
    %v201 = vmul.f32 %v95, %v198
    %v202 = vmul.f32 %v96, %v198
    %v203 = vadd.f32 %v193, %v199
    %v204 = vadd.f32 %v194, %v200
    %v205 = vadd.f32 %v195, %v201
    %v206 = vadd.f32 %v196, %v202
    %s207 = sld [smem:[#allocation2 + $0x83]]
    %v208 = vstv %s207
    %v209 = vmul.f32 %v99, %v208
    %v210 = vmul.f32 %v100, %v208
    %v211 = vmul.f32 %v101, %v208
    %v212 = vmul.f32 %v102, %v208
    %v213 = vadd.f32 %v203, %v209
    %v214 = vadd.f32 %v204, %v210
    %v215 = vadd.f32 %v205, %v211
    %v216 = vadd.f32 %v206, %v212
    %s217 = sld [smem:[#allocation2 + $0x84]]
    %v218 = vstv %s217
    %v219 = vmul.f32 %v105, %v218
    %v220 = vmul.f32 %v106, %v218
    %v221 = vmul.f32 %v107, %v218
    %v222 = vmul.f32 %v108, %v218
    %v223 = vadd.f32 %v213, %v219
    %v224 = vadd.f32 %v214, %v220
    %v225 = vadd.f32 %v215, %v221
    %v226 = vadd.f32 %v216, %v222
    %s227 = sld [smem:[#allocation2 + $0x85]]
    %v228 = vstv %s227
    %v229 = vmul.f32 %v111, %v228
    %v230 = vmul.f32 %v112, %v228
    %v231 = vmul.f32 %v113, %v228
    %v232 = vmul.f32 %v114, %v228
    %v233 = vadd.f32 %v223, %v229
    %v234 = vadd.f32 %v224, %v230
    %v235 = vadd.f32 %v225, %v231
    %v236 = vadd.f32 %v226, %v232
    %s237 = sld [smem:[#allocation7 + $0x1]]
    %v238 = vstv %s237
    %v239 = vadd.f32 %v233, %v238
    %v240 = vadd.f32 %v234, %v238
    %v241 = vadd.f32 %v235, %v238
    %v242 = vadd.f32 %v236, %v238
    %v243 = vmax.f32 %v239, 0.0
    %v244 = vmax.f32 %v240, 0.0
    %v245 = vmax.f32 %v241, 0.0
    %v246 = vmax.f32 %v242, 0.0
    %s247 = sld [smem:[#allocation2 + $0x100]]
    %v248 = vstv %s247
    %v249 = vmul.f32 %v81, %v248
    %v250 = vmul.f32 %v82, %v248
    %v251 = vmul.f32 %v83, %v248
    %v252 = vmul.f32 %v84, %v248
    %s253 = sld [smem:[#allocation2 + $0x101]]
    %v254 = vstv %s253
    %v255 = vmul.f32 %v87, %v254
    %v256 = vmul.f32 %v88, %v254
    %v257 = vmul.f32 %v89, %v254
    %v258 = vmul.f32 %v90, %v254
    %v259 = vadd.f32 %v249, %v255
    %v260 = vadd.f32 %v250, %v256
    %v261 = vadd.f32 %v251, %v257
    %v262 = vadd.f32 %v252, %v258
    %s263 = sld [smem:[#allocation2 + $0x102]]
    %v264 = vstv %s263
    %v265 = vmul.f32 %v93, %v264
    %v266 = vmul.f32 %v94, %v264
    %v267 = vmul.f32 %v95, %v264
    %v268 = vmul.f32 %v96, %v264
    %v269 = vadd.f32 %v259, %v265
    %v270 = vadd.f32 %v260, %v266
    %v271 = vadd.f32 %v261, %v267
    %v272 = vadd.f32 %v262, %v268
    %s273 = sld [smem:[#allocation2 + $0x103]]
    %v274 = vstv %s273
    %v275 = vmul.f32 %v99, %v274
    %v276 = vmul.f32 %v100, %v274
    %v277 = vmul.f32 %v101, %v274
    %v278 = vmul.f32 %v102, %v274
    %v279 = vadd.f32 %v269, %v275
    %v280 = vadd.f32 %v270, %v276
    %v281 = vadd.f32 %v271, %v277
    %v282 = vadd.f32 %v272, %v278
    %s283 = sld [smem:[#allocation2 + $0x104]]
    %v284 = vstv %s283
    %v285 = vmul.f32 %v105, %v284
    %v286 = vmul.f32 %v106, %v284
    %v287 = vmul.f32 %v107, %v284
    %v288 = vmul.f32 %v108, %v284
    %v289 = vadd.f32 %v279, %v285
    %v290 = vadd.f32 %v280, %v286
    %v291 = vadd.f32 %v281, %v287
    %v292 = vadd.f32 %v282, %v288
    %s293 = sld [smem:[#allocation2 + $0x105]]
    %v294 = vstv %s293
    %v295 = vmul.f32 %v111, %v294
    %v296 = vmul.f32 %v112, %v294
    %v297 = vmul.f32 %v113, %v294
    %v298 = vmul.f32 %v114, %v294
    %v299 = vadd.f32 %v289, %v295
    %v300 = vadd.f32 %v290, %v296
    %v301 = vadd.f32 %v291, %v297
    %v302 = vadd.f32 %v292, %v298
    %s303 = sld [smem:[#allocation7 + $0x2]]
    %v304 = vstv %s303
    %v305 = vadd.f32 %v299, %v304
    %v306 = vadd.f32 %v300, %v304
    %v307 = vadd.f32 %v301, %v304
    %v308 = vadd.f32 %v302, %v304
    %v309 = vmax.f32 %v305, 0.0
    %v310 = vmax.f32 %v306, 0.0
    %v311 = vmax.f32 %v307, 0.0
    %v312 = vmax.f32 %v308, 0.0
    %s313 = sld [smem:[#allocation8]]
    %v314 = vstv %s313
    %v315 = vmul.f32 %v177, %v314
    %v316 = vmul.f32 %v178, %v314
    %v317 = vmul.f32 %v179, %v314
    %v318 = vmul.f32 %v180, %v314
    %s319 = sld [smem:[#allocation8 + $0x1]]
    %v320 = vstv %s319
    %v321 = vmul.f32 %v243, %v320
    %v322 = vmul.f32 %v244, %v320
    %v323 = vmul.f32 %v245, %v320
    %v324 = vmul.f32 %v246, %v320
    %v325 = vadd.f32 %v315, %v321
    %v326 = vadd.f32 %v316, %v322
    %v327 = vadd.f32 %v317, %v323
    %v328 = vadd.f32 %v318, %v324
    %s329 = sld [smem:[#allocation8 + $0x2]]
    %v330 = vstv %s329
    %v331 = vmul.f32 %v309, %v330
    %v332 = vmul.f32 %v310, %v330
    %v333 = vmul.f32 %v311, %v330
    %v334 = vmul.f32 %v312, %v330
    %v335 = vadd.f32 %v325, %v331
    %v336 = vadd.f32 %v326, %v332
    %v337 = vadd.f32 %v327, %v333
    %v338 = vadd.f32 %v328, %v334
    %s339 = sld [smem:[#allocation10]]
    %v340 = vstv %s339
    %v341 = vadd.f32 %v335, %v340
    %v342 = vadd.f32 %v336, %v340
    %v343 = vadd.f32 %v337, %v340
    %v344 = vadd.f32 %v338, %v340
    %345 = vst [vmem:[#allocation12] sm:$0xff] %v341
    %346 = vst [vmem:[#allocation12 + $0x8] sm:$0xff] %v342
    %347 = vst [vmem:[#allocation12 + $0x10] sm:$0xff] %v343
    %348 = vst [vmem:[#allocation12 + $0x18] sm:$0xff] %v344
    %s349 = sld [smem:[#allocation8 + $0x80]]
    %v350 = vstv %s349
    %v351 = vmul.f32 %v177, %v350
    %v352 = vmul.f32 %v178, %v350
    %v353 = vmul.f32 %v179, %v350
    %v354 = vmul.f32 %v180, %v350
    %s355 = sld [smem:[#allocation8 + $0x81]]
    %v356 = vstv %s355
    %v357 = vmul.f32 %v243, %v356
    %v358 = vmul.f32 %v244, %v356
    %v359 = vmul.f32 %v245, %v356
    %v360 = vmul.f32 %v246, %v356
    %v361 = vadd.f32 %v351, %v357
    %v362 = vadd.f32 %v352, %v358
    %v363 = vadd.f32 %v353, %v359
    %v364 = vadd.f32 %v354, %v360
    %s365 = sld [smem:[#allocation8 + $0x82]]
    %v366 = vstv %s365
    %v367 = vmul.f32 %v309, %v366
    %v368 = vmul.f32 %v310, %v366
    %v369 = vmul.f32 %v311, %v366
    %v370 = vmul.f32 %v312, %v366
    %v371 = vadd.f32 %v361, %v367
    %v372 = vadd.f32 %v362, %v368
    %v373 = vadd.f32 %v363, %v369
    %v374 = vadd.f32 %v364, %v370
    %s375 = sld [smem:[#allocation10 + $0x1]]
    %v376 = vstv %s375
    %v377 = vadd.f32 %v371, %v376
    %v378 = vadd.f32 %v372, %v376
    %v379 = vadd.f32 %v373, %v376
    %v380 = vadd.f32 %v374, %v376
    %s381 = scalar_lea.vmem [#allocation12], %s85
    %382 = vst [vmem:[%s381] sm:$0xff] %v377
    %383 = vst [vmem:[%s381 + $0x8] sm:$0xff] %v378
    %384 = vst [vmem:[%s381 + $0x10] sm:$0xff] %v379
    %385 = vst [vmem:[%s381 + $0x18] sm:$0xff] %v380
    // Predicated region
    $region42: #{tpu_custom_call.1} parent=1 // pred_check
      _
    $region43: #{tpu_custom_call.1} parent=1 // pred_check_branch
      %387 = sbr.rel (0) target = $region45
    $region44: #{tpu_custom_call.1} parent=1 // pred_region
      %s389 = ssub.s32 1024, 1024
      %390 = vsyncadd [#allocation4], %s389
      %s391 = sshll.u32 [#allocation12], 4
      %s392 = int_to_ptr.vmem [resolvable:$true] %s391
      %397 = dma.vmem_to_hbm [thread:$0]  %s392, 1024, %s5, [#allocation4], 128, 128, 8
    $region45: #{tpu_custom_call.1} parent=1 // pred_fallthru
      _
    // Predicated region
    $region46: #{tpu_custom_call.1} parent=1 // pred_check
      _
    $region47: #{tpu_custom_call.1} parent=1 // pred_check_branch
      %399 = sbr.rel (0) target = $region49
    $region48: #{tpu_custom_call.1} parent=1 // pred_region
      %400 = dma.done [#allocation4], 1024
    $region49: #{tpu_custom_call.1} parent=1 // pred_fallthru
      _
    %401 = vsyncpa [#allocation3], 1
    %402 = vsyncpa [#allocation4], 1
    %403 = vsyncpa [#allocation5], 1
    %404 = vsyncpa [#allocation6], 1
    %405 = vsyncpa [#allocation9], 1

</llo_original>
